<compile_context>
chip_gen: v6e
topology: v6e:2x2x1
jax: 0.10.0
libtpu: 0.0.40
codegen_flags: <defaults>
</compile_context>

<pallas_src>
import jax
import jax.numpy as jnp
from jax.experimental import pallas as pl
from jax.experimental.pallas import tpu as pltpu


def _qanet_output_kernel(m1_ref, m2_ref, m3_ref, mask_ref,
                         w1a_ref, w1b_ref, w2a_ref, w2b_ref,
                         p1_ref, p2_ref):
    mask = mask_ref[...]          # (TB, S) float32 (pre-cast in wrapper)
    w1a = w1a_ref[...]            # (1, D) float32
    w1b = w1b_ref[...]
    w2a = w2a_ref[...]
    w2b = w2b_ref[...]

    # Keep the big activation blocks in their input dtype (no full-block
    # upcast); the multiply against f32 weights promotes to f32, so the
    # logits and all softmax math remain float32.
    m1 = m1_ref[...]              # (TB, S, D)
    m2 = m2_ref[...]
    m3 = m3_ref[...]

    # cat(a, b) @ W.T == a @ Wa.T + b @ Wb.T  (output width 1 -> squeeze).
    # Fused into a single lane reduction per projection.
    logits1 = jnp.sum(m1 * w1a[None, :, :] + m2 * w1b[None, :, :],
                      axis=-1).astype(jnp.float32)                 # (TB, S)
    logits2 = jnp.sum(m2 * w2a[None, :, :] + m3 * w2b[None, :, :],
                      axis=-1).astype(jnp.float32)                 # (TB, S)

    def masked_log_softmax(logits, m):
        masked = m * logits + (1.0 - m) * (-1e30)
        mx = jnp.max(masked, axis=-1, keepdims=True)
        z = masked - mx
        lse = jnp.log(jnp.sum(jnp.exp(z), axis=-1, keepdims=True))
        return z - lse

    p1_ref[...] = masked_log_softmax(logits1, mask).astype(p1_ref.dtype)
    p2_ref[...] = masked_log_softmax(logits2, mask).astype(p2_ref.dtype)


def _pick_batch_tile(B, S, D, itemsize, vmem_budget_bytes):
    """Largest batch tile whose double-buffered blocks fit the VMEM budget.

    Keeps the sublane (second-last) dim of the (TB, S) mask/output blocks
    either equal to B or a multiple of 8 (layout-legal, unmasked stores).
    """
    per_row = 2 * (3 * S * D * itemsize + S * 4) + 2 * (2 * S * 4)
    cap = max(1, vmem_budget_bytes // max(per_row, 1))
    if B <= cap:
        return B
    return max(8, (cap // 8) * 8)


def qanet_output(M1, M2, M3, mask, W1, W2, *, vmem_budget_bytes=40 << 20):
    """W1, W2: (1, 2*D) linear weights (no bias), as in nn.Linear(2*n_embd, 1)."""
    B, S, D = M1.shape
    W1 = W1.astype(jnp.float32)
    W2 = W2.astype(jnp.float32)
    w1a, w1b = W1[:, :D], W1[:, D:]     # each (1, D)
    w2a, w2b = W2[:, :D], W2[:, D:]
    mask_f = mask.astype(jnp.float32)

    itemsize = jnp.dtype(M1.dtype).itemsize
    TB = _pick_batch_tile(B, S, D, itemsize, vmem_budget_bytes)
    grid = (pl.cdiv(B, TB),)

    spec_m = pl.BlockSpec((TB, S, D), lambda i: (i, 0, 0))
    spec_mask = pl.BlockSpec((TB, S), lambda i: (i, 0))
    spec_w = pl.BlockSpec((1, D), lambda i: (0, 0))
    spec_out = pl.BlockSpec((TB, S), lambda i: (i, 0))

    # Double-buffered inputs + weights + outputs, with 2x headroom, clamped so
    # it stays within every generation's physical VMEM (v7x has 64 MiB/TC).
    block_bytes = (2 * (3 * TB * S * D * itemsize + TB * S * 4 + 4 * D * 4)
                   + 2 * (2 * TB * S * 4))
    vmem_limit = int(min(100 << 20, max(32 << 20, 2 * block_bytes)))

    cost = pl.CostEstimate(
        flops=8 * B * S * D + 12 * B * S,
        transcendentals=2 * B * S,
        bytes_accessed=3 * B * S * D * itemsize + B * S * 4 + 2 * B * S * 4,
    )

    p1, p2 = pl.pallas_call(
        _qanet_output_kernel,
        out_shape=(jax.ShapeDtypeStruct((B, S), jnp.float32),
                   jax.ShapeDtypeStruct((B, S), jnp.float32)),
        grid=grid,
        in_specs=[spec_m, spec_m, spec_m, spec_mask,
                  spec_w, spec_w, spec_w, spec_w],
        out_specs=(spec_out, spec_out),
        compiler_params=pltpu.CompilerParams(
            dimension_semantics=("parallel",),
            vmem_limit_bytes=vmem_limit),
        cost_estimate=cost,
    )(M1, M2, M3, mask_f, w1a, w1b, w2a, w2b)
    return p1, p2


def _reference(M1, M2, M3, mask, W1, W2):
    x1 = jnp.concatenate([M1, M2], axis=2)
    x2 = jnp.concatenate([M2, M3], axis=2)
    l1 = jnp.squeeze(x1 @ W1.T, axis=-1)
    l2 = jnp.squeeze(x2 @ W2.T, axis=-1)
    m = mask.astype(jnp.float32)
    ml1 = m * l1 + (1.0 - m) * (-1e30)
    ml2 = m * l2 + (1.0 - m) * (-1e30)
    return jax.nn.log_softmax(ml1, axis=-1), jax.nn.log_softmax(ml2, axis=-1)


if __name__ == "__main__":
    B, S, D = 2, 8, 32   # batch, seq_len, n_embd
    key = jax.random.PRNGKey(0)
    k1, k2, k3, k4, k5 = jax.random.split(key, 5)

    M1 = jax.random.normal(k1, (B, S, D), dtype=jnp.float32)
    M2 = jax.random.normal(k2, (B, S, D), dtype=jnp.float32)
    M3 = jax.random.normal(k3, (B, S, D), dtype=jnp.float32)

    # mask: 1 for valid positions, 0 for padding (last 2 positions of batch 1 masked)
    mask = jnp.ones((B, S), dtype=jnp.float32)
    mask = mask.at[1, S - 2:].set(0.0)

    # nn.Linear(2*D, 1, bias=False) weights, deterministic uniform(-bound, bound)
    bound = 1.0 / (2.0 * D) ** 0.5
    W1 = jax.random.uniform(k4, (1, 2 * D), minval=-bound, maxval=bound,
                            dtype=jnp.float32)
    W2 = jax.random.uniform(k5, (1, 2 * D), minval=-bound, maxval=bound,
                            dtype=jnp.float32)

    p1, p2 = qanet_output(M1, M2, M3, mask, W1, W2)
    jax.block_until_ready((p1, p2))

    r1, r2 = _reference(M1, M2, M3, mask, W1, W2)
    assert jnp.allclose(p1, r1, atol=1e-5), "p1 mismatch vs reference"
    assert jnp.allclose(p2, r2, atol=1e-5), "p2 mismatch vs reference"

    print("KERNEL_OK")
</pallas_src>

<mosaic_0001>
module attributes {stable_mosaic.version = 11 : i64} {
  func.func @_qanet_output_kernel(%arg0: i32, %arg1: memref<2x8x32xf32, #tpu.memory_space<vmem>>, %arg2: memref<2x8x32xf32, #tpu.memory_space<vmem>>, %arg3: memref<2x8x32xf32, #tpu.memory_space<vmem>>, %arg4: memref<2x8xf32, #tpu.memory_space<vmem>>, %arg5: memref<1x32xf32, #tpu.memory_space<vmem>>, %arg6: memref<1x32xf32, #tpu.memory_space<vmem>>, %arg7: memref<1x32xf32, #tpu.memory_space<vmem>>, %arg8: memref<1x32xf32, #tpu.memory_space<vmem>>, %arg9: memref<2x8xf32, #tpu.memory_space<vmem>>, %arg10: memref<2x8xf32, #tpu.memory_space<vmem>>) attributes {dimension_semantics = [#tpu.dimension_semantics<parallel>], iteration_bounds = array<i64: 1>, scalar_prefetch = 0 : i64, scratch_operands = 0 : i64, tpu.core_type = #tpu.core_type<tc>, window_params = [{transform_indices = @transform_0, window_bounds = array<i64: 2, 8, 32>}, {transform_indices = @transform_1, window_bounds = array<i64: 2, 8, 32>}, {transform_indices = @transform_2, window_bounds = array<i64: 2, 8, 32>}, {transform_indices = @transform_3, window_bounds = array<i64: 2, 8>}, {pipeline_mode = #tpu.pipeline_mode<synchronous>, transform_indices = @transform_4, window_bounds = array<i64: 1, 32>}, {pipeline_mode = #tpu.pipeline_mode<synchronous>, transform_indices = @transform_5, window_bounds = array<i64: 1, 32>}, {pipeline_mode = #tpu.pipeline_mode<synchronous>, transform_indices = @transform_6, window_bounds = array<i64: 1, 32>}, {pipeline_mode = #tpu.pipeline_mode<synchronous>, transform_indices = @transform_7, window_bounds = array<i64: 1, 32>}, {transform_indices = @transform_8, window_bounds = array<i64: 2, 8>}, {transform_indices = @transform_9, window_bounds = array<i64: 2, 8>}]} {
    %c0 = arith.constant 0 : index
    %c0_0 = arith.constant 0 : index
    %0 = vector.load %arg4[%c0, %c0_0] : memref<2x8xf32, #tpu.memory_space<vmem>>, vector<2x8xf32>
    %c0_1 = arith.constant 0 : index
    %c0_2 = arith.constant 0 : index
    %1 = vector.load %arg5[%c0_1, %c0_2] : memref<1x32xf32, #tpu.memory_space<vmem>>, vector<1x32xf32>
    %c0_3 = arith.constant 0 : index
    %c0_4 = arith.constant 0 : index
    %2 = vector.load %arg6[%c0_3, %c0_4] : memref<1x32xf32, #tpu.memory_space<vmem>>, vector<1x32xf32>
    %c0_5 = arith.constant 0 : index
    %c0_6 = arith.constant 0 : index
    %3 = vector.load %arg7[%c0_5, %c0_6] : memref<1x32xf32, #tpu.memory_space<vmem>>, vector<1x32xf32>
    %c0_7 = arith.constant 0 : index
    %c0_8 = arith.constant 0 : index
    %4 = vector.load %arg8[%c0_7, %c0_8] : memref<1x32xf32, #tpu.memory_space<vmem>>, vector<1x32xf32>
    %c0_9 = arith.constant 0 : index
    %c0_10 = arith.constant 0 : index
    %c0_11 = arith.constant 0 : index
    %5 = vector.load %arg1[%c0_9, %c0_10, %c0_11] : memref<2x8x32xf32, #tpu.memory_space<vmem>>, vector<2x8x32xf32>
    %c0_12 = arith.constant 0 : index
    %c0_13 = arith.constant 0 : index
    %c0_14 = arith.constant 0 : index
    %6 = vector.load %arg2[%c0_12, %c0_13, %c0_14] : memref<2x8x32xf32, #tpu.memory_space<vmem>>, vector<2x8x32xf32>
    %c0_15 = arith.constant 0 : index
    %c0_16 = arith.constant 0 : index
    %c0_17 = arith.constant 0 : index
    %7 = vector.load %arg3[%c0_15, %c0_16, %c0_17] : memref<2x8x32xf32, #tpu.memory_space<vmem>>, vector<2x8x32xf32>
    %8 = vector.shape_cast %1 : vector<1x32xf32> to vector<1x1x32xf32>
    %9 = vector.broadcast %8 : vector<1x1x32xf32> to vector<2x8x32xf32>
    %10 = arith.mulf %5, %9 : vector<2x8x32xf32>
    %11 = vector.shape_cast %2 : vector<1x32xf32> to vector<1x1x32xf32>
    %12 = vector.broadcast %11 : vector<1x1x32xf32> to vector<2x8x32xf32>
    %13 = arith.mulf %6, %12 : vector<2x8x32xf32>
    %14 = arith.addf %10, %13 : vector<2x8x32xf32>
    %cst = arith.constant dense<0.000000e+00> : vector<2x8xf32>
    %15 = vector.multi_reduction <add>, %14, %cst [2] : vector<2x8x32xf32> to vector<2x8xf32>
    %16 = vector.shape_cast %3 : vector<1x32xf32> to vector<1x1x32xf32>
    %17 = vector.broadcast %16 : vector<1x1x32xf32> to vector<2x8x32xf32>
    %18 = arith.mulf %6, %17 : vector<2x8x32xf32>
    %19 = vector.shape_cast %4 : vector<1x32xf32> to vector<1x1x32xf32>
    %20 = vector.broadcast %19 : vector<1x1x32xf32> to vector<2x8x32xf32>
    %21 = arith.mulf %7, %20 : vector<2x8x32xf32>
    %22 = arith.addf %18, %21 : vector<2x8x32xf32>
    %cst_18 = arith.constant dense<0.000000e+00> : vector<2x8xf32>
    %23 = vector.multi_reduction <add>, %22, %cst_18 [2] : vector<2x8x32xf32> to vector<2x8xf32>
    %24 = arith.mulf %0, %15 : vector<2x8xf32>
    %cst_19 = arith.constant 1.000000e+00 : f32
    %25 = vector.broadcast %cst_19 : f32 to vector<2x8xf32>
    %26 = arith.subf %25, %0 : vector<2x8xf32>
    %cst_20 = arith.constant -1.000000e+30 : f32
    %27 = vector.broadcast %cst_20 : f32 to vector<2x8xf32>
    %28 = arith.mulf %26, %27 : vector<2x8xf32>
    %29 = arith.addf %24, %28 : vector<2x8xf32>
    %cst_21 = arith.constant dense<0xFF800000> : vector<2xf32>
    %30 = vector.multi_reduction <maximumf>, %29, %cst_21 [1] : vector<2x8xf32> to vector<2xf32>
    %31 = vector.shape_cast %30 : vector<2xf32> to vector<2x1xf32>
    %32 = vector.broadcast %31 : vector<2x1xf32> to vector<2x8xf32>
    %33 = arith.subf %29, %32 : vector<2x8xf32>
    %34 = math.exp %33 : vector<2x8xf32>
    %cst_22 = arith.constant dense<0.000000e+00> : vector<2xf32>
    %35 = vector.multi_reduction <add>, %34, %cst_22 [1] : vector<2x8xf32> to vector<2xf32>
    %36 = vector.shape_cast %35 : vector<2xf32> to vector<2x1xf32>
    %37 = math.log %36 : vector<2x1xf32>
    %38 = vector.broadcast %37 : vector<2x1xf32> to vector<2x8xf32>
    %39 = arith.subf %33, %38 : vector<2x8xf32>
    %c0_23 = arith.constant 0 : index
    %c0_24 = arith.constant 0 : index
    %40 = vector.load %arg9[%c0_23, %c0_24] : memref<2x8xf32, #tpu.memory_space<vmem>>, vector<2x8xf32>
    tpu.vector_store %arg9[%c0_23, %c0_24], %39 {strides = array<i32>} : memref<2x8xf32, #tpu.memory_space<vmem>>, vector<2x8xf32>,
    %41 = arith.mulf %0, %23 : vector<2x8xf32>
    %cst_25 = arith.constant 1.000000e+00 : f32
    %42 = vector.broadcast %cst_25 : f32 to vector<2x8xf32>
    %43 = arith.subf %42, %0 : vector<2x8xf32>
    %cst_26 = arith.constant -1.000000e+30 : f32
    %44 = vector.broadcast %cst_26 : f32 to vector<2x8xf32>
    %45 = arith.mulf %43, %44 : vector<2x8xf32>
    %46 = arith.addf %41, %45 : vector<2x8xf32>
    %cst_27 = arith.constant dense<0xFF800000> : vector<2xf32>
    %47 = vector.multi_reduction <maximumf>, %46, %cst_27 [1] : vector<2x8xf32> to vector<2xf32>
    %48 = vector.shape_cast %47 : vector<2xf32> to vector<2x1xf32>
    %49 = vector.broadcast %48 : vector<2x1xf32> to vector<2x8xf32>
    %50 = arith.subf %46, %49 : vector<2x8xf32>
    %51 = math.exp %50 : vector<2x8xf32>
    %cst_28 = arith.constant dense<0.000000e+00> : vector<2xf32>
    %52 = vector.multi_reduction <add>, %51, %cst_28 [1] : vector<2x8xf32> to vector<2xf32>
    %53 = vector.shape_cast %52 : vector<2xf32> to vector<2x1xf32>
    %54 = math.log %53 : vector<2x1xf32>
    %55 = vector.broadcast %54 : vector<2x1xf32> to vector<2x8xf32>
    %56 = arith.subf %50, %55 : vector<2x8xf32>
    %c0_29 = arith.constant 0 : index
    %c0_30 = arith.constant 0 : index
    %57 = vector.load %arg10[%c0_29, %c0_30] : memref<2x8xf32, #tpu.memory_space<vmem>>, vector<2x8xf32>
    tpu.vector_store %arg10[%c0_29, %c0_30], %56 {strides = array<i32>} : memref<2x8xf32, #tpu.memory_space<vmem>>, vector<2x8xf32>,
    return
  }
  func.func @transform_0(%arg0: i32) -> (i32, i32, i32) {
    %c0_i32 = arith.constant 0 : i32
    %c0_i32_0 = arith.constant 0 : i32
    %c0_i32_1 = arith.constant 0 : i32
    return %arg0, %c0_i32, %c0_i32_0 : i32, i32, i32
  }
  func.func @transform_1(%arg0: i32) -> (i32, i32, i32) {
    %c0_i32 = arith.constant 0 : i32
    %c0_i32_0 = arith.constant 0 : i32
    %c0_i32_1 = arith.constant 0 : i32
    return %arg0, %c0_i32, %c0_i32_0 : i32, i32, i32
  }
  func.func @transform_2(%arg0: i32) -> (i32, i32, i32) {
    %c0_i32 = arith.constant 0 : i32
    %c0_i32_0 = arith.constant 0 : i32
    %c0_i32_1 = arith.constant 0 : i32
    return %arg0, %c0_i32, %c0_i32_0 : i32, i32, i32
  }
  func.func @transform_3(%arg0: i32) -> (i32, i32) {
    %c0_i32 = arith.constant 0 : i32
    %c0_i32_0 = arith.constant 0 : i32
    return %arg0, %c0_i32 : i32, i32
  }
  func.func @transform_4(%arg0: i32) -> (i32, i32) {
    %c0_i32 = arith.constant 0 : i32
    %c0_i32_0 = arith.constant 0 : i32
    %c0_i32_1 = arith.constant 0 : i32
    return %c0_i32, %c0_i32_0 : i32, i32
  }
  func.func @transform_5(%arg0: i32) -> (i32, i32) {
    %c0_i32 = arith.constant 0 : i32
    %c0_i32_0 = arith.constant 0 : i32
    %c0_i32_1 = arith.constant 0 : i32
    return %c0_i32, %c0_i32_0 : i32, i32
  }
  func.func @transform_6(%arg0: i32) -> (i32, i32) {
    %c0_i32 = arith.constant 0 : i32
    %c0_i32_0 = arith.constant 0 : i32
    %c0_i32_1 = arith.constant 0 : i32
    return %c0_i32, %c0_i32_0 : i32, i32
  }
  func.func @transform_7(%arg0: i32) -> (i32, i32) {
    %c0_i32 = arith.constant 0 : i32
    %c0_i32_0 = arith.constant 0 : i32
    %c0_i32_1 = arith.constant 0 : i32
    return %c0_i32, %c0_i32_0 : i32, i32
  }
  func.func @transform_8(%arg0: i32) -> (i32, i32) {
    %c0_i32 = arith.constant 0 : i32
    %c0_i32_0 = arith.constant 0 : i32
    return %arg0, %c0_i32 : i32, i32
  }
  func.func @transform_9(%arg0: i32) -> (i32, i32) {
    %c0_i32 = arith.constant 0 : i32
    %c0_i32_0 = arith.constant 0 : i32
    return %arg0, %c0_i32 : i32, i32
  }
}

</mosaic_0001>

<llo_original>
// kernel: tpu_custom_call.1
$region0: #{tpu_custom_call.1}
  #allocation0 [shape = 'u32[]', space=smem, size = 0x4, offset = 0x4, fixed_abs, tag = 'smem constant byte address 0x4 - core index']
  #allocation1 [shape = 'u32[144,128]{1,0:T(1,128)}', space=vmem, size = 0x12000, scoped, tag = 'internal scratch']
  %s0 = inlined_call_operand.hbm [shape: f32[2,8,32], index: 0, kind: input, shape index: {}]
  %s1 = inlined_call_operand.hbm [shape: f32[2,8,32], index: 1, kind: input, shape index: {}]
  %s2 = inlined_call_operand.hbm [shape: f32[2,8,32], index: 2, kind: input, shape index: {}]
  %s3 = inlined_call_operand.vmem [shape: f32[2,8], index: 3, kind: input, shape index: {}]
  %s4 = inlined_call_operand.vmem [shape: f32[1,32], index: 4, kind: input, shape index: {}]
  %s5 = inlined_call_operand.vmem [shape: f32[1,32], index: 5, kind: input, shape index: {}]
  %s6 = inlined_call_operand.vmem [shape: f32[1,32], index: 6, kind: input, shape index: {}]
  %s7 = inlined_call_operand.vmem [shape: f32[1,32], index: 7, kind: input, shape index: {}]
  %s8 = inlined_call_operand.hbm [shape: f32[2,8], index: 8, kind: output, shape index: {0}]
  %s9 = inlined_call_operand.hbm [shape: f32[2,8], index: 9, kind: output, shape index: {1}]
  %10 = xla_tuple %s8, %s9
  %s11 = sld [smem:[#allocation0]]
  $region62: #{tpu_custom_call.1} parent=0
    _
  %s13 = ssub.s32 1, %s11
  %s14 = scalar_select 0, %s13, %s11
  $region1: #{tpu_custom_call.1} parent=0
    #allocation2 [shape = 'u8[8192]{0}', space=vmem, size = 0x2000, scoped, tag = 'input window, operand 0, single buffered']
    #allocation3 [shape = 's32[1]{0}', space=sflag, size = 0x4, scoped, tag = 'scoped memory for tpu_custom_call.1']
    #allocation4 [shape = 's32[1]{0}', space=sflag, size = 0x4, scoped, tag = 'scoped memory for tpu_custom_call.1']
    #allocation5 [shape = 'u8[8192]{0}', space=vmem, size = 0x2000, scoped, tag = 'input window, operand 1, single buffered']
    #allocation6 [shape = 's32[1]{0}', space=sflag, size = 0x4, scoped, tag = 'scoped memory for tpu_custom_call.1']
    #allocation7 [shape = 'u8[8192]{0}', space=vmem, size = 0x2000, scoped, tag = 'input window, operand 2, single buffered']
    #allocation8 [shape = 'u8[1024]{0}', space=vmem, size = 0x400, scoped, tag = 'output window, operand 0, single buffered']
    #allocation9 [shape = 'u8[1024]{0}', space=vmem, size = 0x400, scoped, tag = 'output window, operand 1, single buffered']
    #allocation10 [shape = 's32[1]{0}', space=sflag, size = 0x4, scoped, tag = 'scoped memory for tpu_custom_call.1']
    %15 = vsyncpa [#allocation3], 0
    %16 = vsyncpa [#allocation6], 0
    %17 = vsyncpa [#allocation4], 0
    %18 = vsyncpa [#allocation10], 0
    // Predicated region
    $region2: #{tpu_custom_call.1} parent=1 // pred_check
      _
    $region3: #{tpu_custom_call.1} parent=1 // pred_check_branch
      %20 = sbr.rel (0) target = $region5
    $region4: #{tpu_custom_call.1} parent=1 // pred_region
      %s22 = ssub.s32 256, 256
      %23 = vsyncadd [#allocation3], %s22
      %s24 = sshll.u32 [#allocation2], 4
      %s25 = int_to_ptr.vmem [resolvable:$true] %s24
      %30 = dma.hbm_to_vmem [thread:$0]  %s0, 256, %s25, [#allocation3], 128, 128, 8
    $region5: #{tpu_custom_call.1} parent=1 // pred_fallthru
      _
    // Predicated region
    $region6: #{tpu_custom_call.1} parent=1 // pred_check
      _
    $region7: #{tpu_custom_call.1} parent=1 // pred_check_branch
      %32 = sbr.rel (0) target = $region9
    $region8: #{tpu_custom_call.1} parent=1 // pred_region
      %s34 = ssub.s32 256, 256
      %35 = vsyncadd [#allocation6], %s34
      %s36 = sshll.u32 [#allocation5], 4
      %s37 = int_to_ptr.vmem [resolvable:$true] %s36
      %42 = dma.hbm_to_vmem [thread:$0]  %s1, 256, %s37, [#allocation6], 128, 128, 8
    $region9: #{tpu_custom_call.1} parent=1 // pred_fallthru
      _
    // Predicated region
    $region10: #{tpu_custom_call.1} parent=1 // pred_check
      _
    $region11: #{tpu_custom_call.1} parent=1 // pred_check_branch
      %44 = sbr.rel (0) target = $region13
    $region12: #{tpu_custom_call.1} parent=1 // pred_region
      %s46 = ssub.s32 256, 256
      %47 = vsyncadd [#allocation6], %s46
      %s48 = sshll.u32 [#allocation7], 4
      %s49 = int_to_ptr.vmem [resolvable:$true] %s48
      %54 = dma.hbm_to_vmem [thread:$0]  %s2, 256, %s49, [#allocation6], 128, 128, 8
    $region13: #{tpu_custom_call.1} parent=1 // pred_fallthru
      _
    // Predicated region
    $region14: #{tpu_custom_call.1} parent=1 // pred_check
      _
    $region15: #{tpu_custom_call.1} parent=1 // pred_check_branch
      %56 = sbr.rel (0) target = $region17
    $region16: #{tpu_custom_call.1} parent=1 // pred_region
      _
    $region17: #{tpu_custom_call.1} parent=1 // pred_fallthru
      _
    // Predicated region
    $region18: #{tpu_custom_call.1} parent=1 // pred_check
      _
    $region19: #{tpu_custom_call.1} parent=1 // pred_check_branch
      %58 = sbr.rel (0) target = $region21
    $region20: #{tpu_custom_call.1} parent=1 // pred_region
      _
    $region21: #{tpu_custom_call.1} parent=1 // pred_fallthru
      _
    // Predicated region
    $region22: #{tpu_custom_call.1} parent=1 // pred_check
      _
    $region23: #{tpu_custom_call.1} parent=1 // pred_check_branch
      %60 = sbr.rel (0) target = $region25
    $region24: #{tpu_custom_call.1} parent=1 // pred_region
      _
    $region25: #{tpu_custom_call.1} parent=1 // pred_fallthru
      _
    // Predicated region
    $region26: #{tpu_custom_call.1} parent=1 // pred_check
      _
    $region27: #{tpu_custom_call.1} parent=1 // pred_check_branch
      %62 = sbr.rel (0) target = $region29
    $region28: #{tpu_custom_call.1} parent=1 // pred_region
      _
    $region29: #{tpu_custom_call.1} parent=1 // pred_fallthru
      _
    // Predicated region
    $region30: #{tpu_custom_call.1} parent=1 // pred_check
      _
    $region31: #{tpu_custom_call.1} parent=1 // pred_check_branch
      %64 = sbr.rel (0) target = $region33
    $region32: #{tpu_custom_call.1} parent=1 // pred_region
      _
    $region33: #{tpu_custom_call.1} parent=1 // pred_fallthru
      _
    // Predicated region
    $region34: #{tpu_custom_call.1} parent=1 // pred_check
      _
    $region35: #{tpu_custom_call.1} parent=1 // pred_check_branch
      %66 = sbr.rel (0) target = $region37
    $region36: #{tpu_custom_call.1} parent=1 // pred_region
      %67 = dma.done [#allocation3], 256
    $region37: #{tpu_custom_call.1} parent=1 // pred_fallthru
      _
    // Predicated region
    $region38: #{tpu_custom_call.1} parent=1 // pred_check
      _
    $region39: #{tpu_custom_call.1} parent=1 // pred_check_branch
      %69 = sbr.rel (0) target = $region41
    $region40: #{tpu_custom_call.1} parent=1 // pred_region
      %70 = dma.done [#allocation6], 256
    $region41: #{tpu_custom_call.1} parent=1 // pred_fallthru
      _
    // Predicated region
    $region42: #{tpu_custom_call.1} parent=1 // pred_check
      _
    $region43: #{tpu_custom_call.1} parent=1 // pred_check_branch
      %72 = sbr.rel (0) target = $region45
    $region44: #{tpu_custom_call.1} parent=1 // pred_region
      %73 = dma.done [#allocation6], 256
    $region45: #{tpu_custom_call.1} parent=1 // pred_fallthru
      _
    %v74 = vld [vmem:[%s3] sm:$0x3]
    %v75 = vld [vmem:[%s4] sm:$0x1]
    %v76 = vld [vmem:[%s5] sm:$0x1]
    %v77 = vld [vmem:[%s6] sm:$0x1]
    %v78 = vld [vmem:[%s7] sm:$0x1]
    %v79 = vld [vmem:[#allocation2] sm:$0xff]
    %v80 = vld [vmem:[#allocation2 + $0x8] sm:$0xff]
    %v81 = vld [vmem:[#allocation5] sm:$0xff]
    %v82 = vld [vmem:[#allocation5 + $0x8] sm:$0xff]
    %v83 = vld [vmem:[#allocation7] sm:$0xff]
    %v84 = vld [vmem:[#allocation7 + $0x8] sm:$0xff]
    %v86 = vlaneseq
    %v87 = vshrl.u32 %v86, 7
    %v88 = vsub.s32 0, %v87
    %v89 = vrot.slane %v75, %v88
    %v91 = vmul.f32 %v79, %v89
    %v92 = vmul.f32 %v80, %v89
    %v94 = vlaneseq
    %v95 = vshrl.u32 %v94, 7
    %v96 = vsub.s32 0, %v95
    %v97 = vrot.slane %v76, %v96
    %v99 = vmul.f32 %v81, %v97
    %v100 = vmul.f32 %v82, %v97
    %v101 = vadd.f32 %v91, %v99
    %v102 = vadd.f32 %v92, %v100
    %vm103 = vcmask 261120
    %v104 = vsel %vm103, %v101, 0.0
    %105 = vadd.xlane.f32.xlu0 %v104
    %v106 = vpop.xlane.xlu0 %105
    %v107 = vsel %vm103, %v102, 0.0
    %108 = vadd.xlane.f32.xlu0 %v107
    %v109 = vpop.xlane.xlu0 %108
    %v111 = vlaneseq
    %v112 = vshrl.u32 %v111, 7
    %v113 = vsub.s32 0, %v112
    %v114 = vrot.slane %v77, %v113
    %v116 = vmul.f32 %v81, %v114
    %v117 = vmul.f32 %v82, %v114
    %v119 = vlaneseq
    %v120 = vshrl.u32 %v119, 7
    %v121 = vsub.s32 0, %v120
    %v122 = vrot.slane %v78, %v121
    %v124 = vmul.f32 %v83, %v122
    %v125 = vmul.f32 %v84, %v122
    %v126 = vadd.f32 %v116, %v124
    %v127 = vadd.f32 %v117, %v125
    %v128 = vsel %vm103, %v126, 0.0
    %129 = vadd.xlane.f32.xlu0 %v128
    %v130 = vpop.xlane.xlu0 %129
    %v131 = vsel %vm103, %v127, 0.0
    %132 = vadd.xlane.f32.xlu0 %v131
    %v133 = vpop.xlane.xlu0 %132
    %v136 = vlaneseq
    %v137 = vand.u32 %v136, 127
    %v138 = vlaneseq
    %v139 = vshrl.u32 %v138, 7
    %v140 = vsub.s32 %v137, %v139
    %v141 = vrot.slane %v106, %v140
    %v142 = vlaneseq
    %v143 = vshrl.u32 %v142, 7
    %v144 = vsub.s32 %v137, %v143
    %v145 = vrot.slane %v109, %v144
    %vm146 = vcmask 1041409
    %v147 = vsel %vm146, %v145, %v141
    %v149 = vmul.f32 %v74, %v147
    %v150 = vsub.f32 1.0, %v74
    %v151 = vmul.f32 %v150, -1e+30
    %v152 = vadd.f32 %v149, %v151
    %vm153 = vcmask 58368
    %v154 = vsel %vm153, %v152, -inf
    %155 = vmax.xlane.f32.xlu0 %v154
    %v156 = vpop.xlane.xlu0 %155
    %v157 = vsub.f32 %v152, %v156
    %v158 = vmul.f32 %v157, 1.442695
    %v159 = vpow.pop %v158
    %v160 = vsel %vm153, %v159, 0.0
    %161 = vadd.xlane.f32.xlu0 %v160
    %v162 = vpop.xlane.xlu0 %161
    %v163 = vlog2.pop %v162
    %v164 = vmul.f32 %v163, 0.6931472
    %v165 = vsub.f32 %v157, %v164
    %166 = vst.msk [vmem:[#allocation8] sm:$0x3] %vm153, %v165
    %v169 = vlaneseq
    %v170 = vshrl.u32 %v169, 7
    %v171 = vsub.s32 %v137, %v170
    %v172 = vrot.slane %v130, %v171
    %v173 = vlaneseq
    %v174 = vshrl.u32 %v173, 7
    %v175 = vsub.s32 %v137, %v174
    %v176 = vrot.slane %v133, %v175
    %v177 = vsel %vm146, %v176, %v172
    %v179 = vmul.f32 %v74, %v177
    %v180 = vadd.f32 %v179, %v151
    %v181 = vsel %vm153, %v180, -inf
    %182 = vmax.xlane.f32.xlu0 %v181
    %v183 = vpop.xlane.xlu0 %182
    %v184 = vsub.f32 %v180, %v183
    %v185 = vmul.f32 %v184, 1.442695
    %v186 = vpow.pop %v185
    %v187 = vsel %vm153, %v186, 0.0
    %188 = vadd.xlane.f32.xlu0 %v187
    %v189 = vpop.xlane.xlu0 %188
    %v190 = vlog2.pop %v189
    %v191 = vmul.f32 %v190, 0.6931472
    %v192 = vsub.f32 %v184, %v191
    %193 = vst.msk [vmem:[#allocation9] sm:$0x3] %vm153, %v192
    // Predicated region
    $region46: #{tpu_custom_call.1} parent=1 // pred_check
      _
    $region47: #{tpu_custom_call.1} parent=1 // pred_check_branch
      %195 = sbr.rel (0) target = $region49
    $region48: #{tpu_custom_call.1} parent=1 // pred_region
      %s197 = ssub.s32 32, 32
      %198 = vsyncadd [#allocation4], %s197
      %s200 = sshll.u32 [#allocation8], 4
      %s201 = int_to_ptr.vmem [resolvable:$true] %s200
      %203 = dma.vmem_to_hbm [thread:$0]  %s201, 32, %s8, [#allocation4]
    $region49: #{tpu_custom_call.1} parent=1 // pred_fallthru
      _
    // Predicated region
    $region50: #{tpu_custom_call.1} parent=1 // pred_check
      _
    $region51: #{tpu_custom_call.1} parent=1 // pred_check_branch
      %205 = sbr.rel (0) target = $region53
    $region52: #{tpu_custom_call.1} parent=1 // pred_region
      %s207 = ssub.s32 32, 32
      %208 = vsyncadd [#allocation10], %s207
      %s210 = sshll.u32 [#allocation9], 4
      %s211 = int_to_ptr.vmem [resolvable:$true] %s210
      %213 = dma.vmem_to_hbm [thread:$0]  %s211, 32, %s9, [#allocation10]
    $region53: #{tpu_custom_call.1} parent=1 // pred_fallthru
      _
    // Predicated region
    $region54: #{tpu_custom_call.1} parent=1 // pred_check
      _
    $region55: #{tpu_custom_call.1} parent=1 // pred_check_branch
      %215 = sbr.rel (0) target = $region57
    $region56: #{tpu_custom_call.1} parent=1 // pred_region
      %216 = dma.done [#allocation4], 32
    $region57: #{tpu_custom_call.1} parent=1 // pred_fallthru
      _
    // Predicated region
    $region58: #{tpu_custom_call.1} parent=1 // pred_check
      _
    $region59: #{tpu_custom_call.1} parent=1 // pred_check_branch
      %218 = sbr.rel (0) target = $region61
    $region60: #{tpu_custom_call.1} parent=1 // pred_region
      %219 = dma.done [#allocation10], 32
    $region61: #{tpu_custom_call.1} parent=1 // pred_fallthru
      _
    %220 = vsyncpa [#allocation3], 1
    %221 = vsyncpa [#allocation6], 1
    %222 = vsyncpa [#allocation4], 1
    %223 = vsyncpa [#allocation10], 1

</llo_original>
